<compile_context>
chip_gen: v7x
topology: tpu7x:2x2x1
jax: 0.10.0
libtpu: 0.0.40
codegen_flags: <defaults>
</compile_context>

<pallas_src>
import math

import jax
import jax.numpy as jnp
from jax import lax
from jax.experimental import pallas as pl
from jax.experimental.pallas import tpu as pltpu


def _make_mc_dropout_kernel(*, drop_prob, replicated):
    """Build the kernel body (static drop_prob / replication flag)."""
    keep_thresh = None
    if drop_prob > 0.0:
        keep_thresh = max(1, min(int(round(drop_prob * (2.0 ** 32))), 2 ** 32 - 1))

    def kernel(seed_ref, *refs):
        if replicated:
            x_ref, rep_ref, w1_ref, b1_ref, w2_ref, b2_ref, o_ref = refs
        else:
            x_ref, w1_ref, b1_ref, w2_ref, b2_ref, o_ref = refs
            rep_ref = None

        # ---- layer1 + ReLU (1/(1-p) already folded into W1/b1) -------------
        # Computed once for the distinct input rows of this tile, NOT per MC
        # sample.  Shapes: (H, K) @ (K, cols) -> (H, cols).
        h = jnp.dot(w1_ref[...], x_ref[...], preferred_element_type=jnp.float32)
        h = jnp.maximum(h + b1_ref[...], 0.0)

        if replicated:
            # Broadcast the shared hidden activations across the MC samples of
            # this lane tile with a tiny 0/1 selector matmul (MXU): rep[n, c]
            # is 1 iff output column c maps to input row n.  Keeps the lane
            # axis dense with zero XLU / lane-shuffle work.
            h = jnp.dot(h, rep_ref[...], preferred_element_type=jnp.float32)

        # ---- MC dropout (training=True) -------------------------------------
        if drop_prob > 0.0:  # static: whole path skipped when p == 0
            hdim, tm = h.shape
            row = lax.broadcasted_iota(jnp.uint32, (hdim, tm), 0)
            col = lax.broadcasted_iota(jnp.uint32, (hdim, tm), 1)
            # Hoisted scalar tile offset -> globally unique element counter, so
            # masks differ across MC samples and across grid tiles.
            # NOTE: wraps after 2^32 hidden-elements (~134M columns at H=32);
            # fine at MC-dropout demo scales.
            off = pl.program_id(0).astype(jnp.uint32) * jnp.uint32(tm * hdim)
            gidx = col * jnp.uint32(hdim) + row + off
            # Single-multiply hash (review: murmur-grade avalanche not needed
            # for dropout masks) -- 1 u32 vmul + 1 xorshift on the VPU.
            bits = (gidx ^ seed_ref[0].astype(jnp.uint32)) * jnp.uint32(0x9E3779B1)
            bits = bits ^ (bits >> 16)
            h = jnp.where(bits >= jnp.uint32(keep_thresh), h, 0.0)

        # ---- layer2 ----------------------------------------------------------
        out = jnp.dot(w2_ref[...], h, preferred_element_type=jnp.float32)
        o_ref[...] = (out + b2_ref[...]).astype(o_ref.dtype)

    return kernel


def prepare_params(w1_torch, b1_torch, w2_torch, b2_torch, drop_prob):
    """One-time parameter prep (call at init, not per forward).

    Keeps PyTorch Linear weights in their native (out_features, in_features)
    layout (the kernel computes W @ x_T), reshapes biases to column vectors,
    and folds the dropout survivor scale 1/(1-p) into layer-1 so the kernel
    only has to mask, never rescale.
    """
    scale = 1.0 / (1.0 - drop_prob) if drop_prob > 0.0 else 1.0
    w1 = jnp.asarray(w1_torch, jnp.float32) * scale                 # (H, K)
    b1 = jnp.asarray(b1_torch, jnp.float32).reshape(-1, 1) * scale  # (H, 1)
    w2 = jnp.asarray(w2_torch, jnp.float32)                         # (2*out, H)
    b2 = jnp.asarray(b2_torch, jnp.float32).reshape(-1, 1)          # (2*out, 1)
    return w1, b1, w2, b2


def _choose_lane_tile(M, N, n_samples):
    """Lane-axis tile (output columns per grid step).

    Must be the full width M, or a multiple of 128 (and of N when n_samples>1
    so each tile holds whole samples).  Default aims for >= 2 balanced tiles
    (v7x has 2 TensorCores) while keeping f32 activations well under the vreg
    file; single-TC v5e/v6e users can force one tile via lane_tile=M.
    """
    base = 128 if n_samples == 1 else math.lcm(128, N)
    if M <= base:
        return M
    if M < 2 * base:
        return base
    cap = 512
    tm = min((M // (2 * base)) * base, max(cap // base, 1) * base)
    return max(tm, base)


def mc_dropout_forward(x, w1, b1, w2, b2, seed, *, drop_prob, n_samples=1,
                       lane_tile=None):
    """Forward pass of MC_Dropout_Model (dropout always on).

    x: (..., input_dim)   -- flattened to N rows (mimics x.view(-1, input_dim))
    w1: (H, input_dim)  b1: (H, 1)  w2: (2*out, H)  b2: (2*out, 1)  (from
    prepare_params).  seed: int32 scalar/array.  n_samples: number of MC
    stochastic passes over the SAME input, all fused into one kernel launch.

    Returns (N, 2*out) if n_samples == 1, else (n_samples, N, 2*out).
    """
    drop_prob = float(drop_prob)
    if not (0.0 <= drop_prob < 1.0):
        raise ValueError("drop_prob must be in [0, 1)")
    n_samples = int(n_samples)
    if n_samples < 1:
        raise ValueError("n_samples must be >= 1")

    H, K = w1.shape
    out2 = w2.shape[0]
    x = jnp.asarray(x, jnp.float32).reshape(-1, K)   # mimic x.view(-1, input_dim)
    N = x.shape[0]
    xT = x.T                                         # (K, N): rows -> lane axis
    M = n_samples * N                                # total output columns

    if lane_tile is None:
        lane_tile = _choose_lane_tile(M, N, n_samples)
    lane_tile = int(min(lane_tile, M))
    if lane_tile != M:
        if lane_tile % 128 != 0:
            raise ValueError("lane_tile must be a multiple of 128 or the full width")
        if n_samples > 1 and lane_tile % N != 0:
            raise ValueError("lane_tile must be a multiple of the row count when n_samples > 1")

    replicated = n_samples > 1
    seed = jnp.asarray(seed, dtype=jnp.int32).reshape((1,))

    kernel = _make_mc_dropout_kernel(drop_prob=drop_prob, replicated=replicated)

    weight_specs = [
        pl.BlockSpec((H, K), lambda i, s: (0, 0)),      # w1 (resident)
        pl.BlockSpec((H, 1), lambda i, s: (0, 0)),      # b1
        pl.BlockSpec((out2, H), lambda i, s: (0, 0)),   # w2
        pl.BlockSpec((out2, 1), lambda i, s: (0, 0)),   # b2
    ]

    if replicated:
        # 0/1 sample-broadcast operator: rep[n, c] = 1 iff column c of a tile
        # maps to input row n.  Identical for every tile (tile starts are
        # multiples of N), built once on the host (a few KB).
        rep = (jnp.arange(lane_tile, dtype=jnp.int32)[None, :] % N ==
               jnp.arange(N, dtype=jnp.int32)[:, None]).astype(jnp.float32)
        in_specs = [
            pl.BlockSpec((K, N), lambda i, s: (0, 0)),            # x: all rows resident
            pl.BlockSpec((N, lane_tile), lambda i, s: (0, 0)),    # sample broadcaster
            *weight_specs,
        ]
        inputs = (xT, rep, w1, b1, w2, b2)
    else:
        in_specs = [
            pl.BlockSpec((K, lane_tile), lambda i, s: (0, i)),    # x columns follow tile
            *weight_specs,
        ]
        inputs = (xT, w1, b1, w2, b2)

    grid = (pl.cdiv(M, lane_tile),)

    out_T = pl.pallas_call(
        kernel,
        out_shape=jax.ShapeDtypeStruct((out2, M), jnp.float32),
        grid_spec=pltpu.PrefetchScalarGridSpec(
            num_scalar_prefetch=1,                     # seed -> SMEM
            grid=grid,
            in_specs=in_specs,
            out_specs=pl.BlockSpec((out2, lane_tile), lambda i, s: (0, i)),
        ),
        compiler_params=pltpu.CompilerParams(
            dimension_semantics=("parallel",),         # shard lane tiles across TCs (v7x)
        ),
    )(seed, *inputs)

    out = out_T.T                                      # (M, 2*out), tiny host transpose
    if n_samples > 1:
        return out.reshape(n_samples, N, out2)
    return out


if __name__ == "__main__":
    # Small shapes consistent with MC_Dropout_Model(input_dim, output_dim, num_units, drop_prob)
    batch = 8
    input_dim = 4
    output_dim = 2
    num_units = 32
    drop_prob = 0.5
    n_mc_samples = 32          # all MC stochastic passes batched into ONE kernel call

    key = jax.random.PRNGKey(0)
    kx, kw1, kb1, kw2, kb2 = jax.random.split(key, 5)

    x = jax.random.uniform(kx, (batch, input_dim), jnp.float32, -2.25, 2.25)

    # PyTorch Linear-style params, stored in PyTorch (out, in) layout.
    bound1 = 1.0 / (input_dim ** 0.5)
    w1_t = jax.random.uniform(kw1, (num_units, input_dim), jnp.float32, -bound1, bound1)
    b1_t = jax.random.uniform(kb1, (num_units,), jnp.float32, -bound1, bound1)
    bound2 = 1.0 / (num_units ** 0.5)
    w2_t = jax.random.uniform(kw2, (2 * output_dim, num_units), jnp.float32, -bound2, bound2)
    b2_t = jax.random.uniform(kb2, (2 * output_dim,), jnp.float32, -bound2, bound2)

    seed = jnp.array([1234], dtype=jnp.int32)

    # plain-JAX reference for the deterministic (p = 0) path
    hp = jax.lax.Precision.HIGHEST
    ref0 = jnp.dot(jnp.maximum(jnp.dot(x, w1_t.T, precision=hp) + b1_t, 0.0),
                   w2_t.T, precision=hp) + b2_t

    # --- check 1: single pass, no dropout, matches the reference -------------
    p0 = prepare_params(w1_t, b1_t, w2_t, b2_t, 0.0)
    out0 = mc_dropout_forward(x, *p0, seed, drop_prob=0.0, n_samples=1)
    out0 = jax.block_until_ready(out0)
    assert out0.shape == (batch, 2 * output_dim), out0.shape
    assert bool(jnp.allclose(out0, ref0, atol=1e-4, rtol=1e-4)), "no-dropout mismatch"

    # --- check 2: replicated (multi-sample) path, no dropout -> all samples equal ref
    out_rep = mc_dropout_forward(x, *p0, seed, drop_prob=0.0, n_samples=4)
    out_rep = jax.block_until_ready(out_rep)
    assert out_rep.shape == (4, batch, 2 * output_dim), out_rep.shape
    assert bool(jnp.allclose(out_rep, ref0[None], atol=1e-4, rtol=1e-4)), "replication mismatch"

    # --- check 3: MC dropout, 32 stochastic samples in one launch -------------
    p = prepare_params(w1_t, b1_t, w2_t, b2_t, drop_prob)
    out = mc_dropout_forward(x, *p, seed, drop_prob=drop_prob, n_samples=n_mc_samples)
    out = jax.block_until_ready(out)
    assert out.shape == (n_mc_samples, batch, 2 * output_dim), out.shape
    assert bool(jnp.all(jnp.isfinite(out)))
    # masks must differ across MC samples -> nonzero predictive spread
    assert float(jnp.max(jnp.std(out, axis=0))) > 0.0, "dropout masks did not vary"

    print("KERNEL_OK")
</pallas_src>

<mosaic_0001>
module attributes {stable_mosaic.version = 11 : i64} {
  func.func @kernel(%arg0: i32, %arg1: memref<1xi32, #tpu.memory_space<smem>>, %arg2: memref<4x8xf32, #tpu.memory_space<vmem>>, %arg3: memref<32x4xf32, #tpu.memory_space<vmem>>, %arg4: memref<32x1xf32, #tpu.memory_space<vmem>>, %arg5: memref<4x32xf32, #tpu.memory_space<vmem>>, %arg6: memref<4x1xf32, #tpu.memory_space<vmem>>, %arg7: memref<4x8xf32, #tpu.memory_space<vmem>>) attributes {dimension_semantics = [#tpu.dimension_semantics<parallel>], iteration_bounds = array<i64: 1>, scalar_prefetch = 1 : i64, scratch_operands = 0 : i64, tpu.core_type = #tpu.core_type<tc>, window_params = [{transform_indices = @transform_0, window_bounds = array<i64: 4, 8>}, {pipeline_mode = #tpu.pipeline_mode<synchronous>, transform_indices = @transform_1, window_bounds = array<i64: 32, 4>}, {pipeline_mode = #tpu.pipeline_mode<synchronous>, transform_indices = @transform_2, window_bounds = array<i64: 32, 1>}, {pipeline_mode = #tpu.pipeline_mode<synchronous>, transform_indices = @transform_3, window_bounds = array<i64: 4, 32>}, {pipeline_mode = #tpu.pipeline_mode<synchronous>, transform_indices = @transform_4, window_bounds = array<i64: 4, 1>}, {transform_indices = @transform_5, window_bounds = array<i64: 4, 8>}]} {
    %c0 = arith.constant 0 : index
    %c0_0 = arith.constant 0 : index
    %0 = vector.load %arg3[%c0, %c0_0] : memref<32x4xf32, #tpu.memory_space<vmem>>, vector<32x4xf32>
    %c0_1 = arith.constant 0 : index
    %c0_2 = arith.constant 0 : index
    %1 = vector.load %arg2[%c0_1, %c0_2] : memref<4x8xf32, #tpu.memory_space<vmem>>, vector<4x8xf32>
    %cst = arith.constant dense<0.000000e+00> : vector<32x8xf32>
    %2 = tpu.matmul %0, %1, %cst {dimension_numbers = #tpu.dot_dimension_numbers<[1], [0], [0], [1], [0, 0, 1, 1], [], []>} : vector<32x4xf32>, vector<4x8xf32>, vector<32x8xf32> -> vector<32x8xf32>
    %c0_3 = arith.constant 0 : index
    %c0_4 = arith.constant 0 : index
    %3 = vector.load %arg4[%c0_3, %c0_4] : memref<32x1xf32, #tpu.memory_space<vmem>>, vector<32x1xf32>
    %4 = vector.broadcast %3 : vector<32x1xf32> to vector<32x8xf32>
    %5 = arith.addf %2, %4 : vector<32x8xf32>
    %cst_5 = arith.constant 0.000000e+00 : f32
    %6 = vector.broadcast %cst_5 : f32 to vector<32x8xf32>
    %7 = arith.maximumf %5, %6 : vector<32x8xf32>
    %c0_6 = arith.constant 0 : index
    %c0_7 = arith.constant 0 : index
    %8 = vector.load %arg5[%c0_6, %c0_7] : memref<4x32xf32, #tpu.memory_space<vmem>>, vector<4x32xf32>
    %cst_8 = arith.constant dense<0.000000e+00> : vector<4x8xf32>
    %9 = tpu.matmul %8, %7, %cst_8 {dimension_numbers = #tpu.dot_dimension_numbers<[1], [0], [0], [1], [0, 0, 1, 1], [], []>} : vector<4x32xf32>, vector<32x8xf32>, vector<4x8xf32> -> vector<4x8xf32>
    %c0_9 = arith.constant 0 : index
    %c0_10 = arith.constant 0 : index
    %10 = vector.load %arg6[%c0_9, %c0_10] : memref<4x1xf32, #tpu.memory_space<vmem>>, vector<4x1xf32>
    %11 = vector.broadcast %10 : vector<4x1xf32> to vector<4x8xf32>
    %12 = arith.addf %9, %11 : vector<4x8xf32>
    %c0_11 = arith.constant 0 : index
    %c0_12 = arith.constant 0 : index
    %13 = vector.load %arg7[%c0_11, %c0_12] : memref<4x8xf32, #tpu.memory_space<vmem>>, vector<4x8xf32>
    tpu.vector_store %arg7[%c0_11, %c0_12], %12 {strides = array<i32>} : memref<4x8xf32, #tpu.memory_space<vmem>>, vector<4x8xf32>,
    return
  }
  func.func @transform_0(%arg0: i32, %arg1: memref<1xi32, #tpu.memory_space<smem>>) -> (i32, i32) {
    %c0_i32 = arith.constant 0 : i32
    %c0_i32_0 = arith.constant 0 : i32
    return %c0_i32, %arg0 : i32, i32
  }
  func.func @transform_1(%arg0: i32, %arg1: memref<1xi32, #tpu.memory_space<smem>>) -> (i32, i32) {
    %c0_i32 = arith.constant 0 : i32
    %c0_i32_0 = arith.constant 0 : i32
    %c0_i32_1 = arith.constant 0 : i32
    return %c0_i32, %c0_i32_0 : i32, i32
  }
  func.func @transform_2(%arg0: i32, %arg1: memref<1xi32, #tpu.memory_space<smem>>) -> (i32, i32) {
    %c0_i32 = arith.constant 0 : i32
    %c0_i32_0 = arith.constant 0 : i32
    %c0_i32_1 = arith.constant 0 : i32
    return %c0_i32, %c0_i32_0 : i32, i32
  }
  func.func @transform_3(%arg0: i32, %arg1: memref<1xi32, #tpu.memory_space<smem>>) -> (i32, i32) {
    %c0_i32 = arith.constant 0 : i32
    %c0_i32_0 = arith.constant 0 : i32
    %c0_i32_1 = arith.constant 0 : i32
    return %c0_i32, %c0_i32_0 : i32, i32
  }
  func.func @transform_4(%arg0: i32, %arg1: memref<1xi32, #tpu.memory_space<smem>>) -> (i32, i32) {
    %c0_i32 = arith.constant 0 : i32
    %c0_i32_0 = arith.constant 0 : i32
    %c0_i32_1 = arith.constant 0 : i32
    return %c0_i32, %c0_i32_0 : i32, i32
  }
  func.func @transform_5(%arg0: i32, %arg1: memref<1xi32, #tpu.memory_space<smem>>) -> (i32, i32) {
    %c0_i32 = arith.constant 0 : i32
    %c0_i32_0 = arith.constant 0 : i32
    return %c0_i32, %arg0 : i32, i32
  }
}

</mosaic_0001>

<llo_original>
// kernel: tpu_custom_call.1
$region0: #{tpu_custom_call.1}
  #allocation0 [shape = 'u32[]', space=smem, size = 0x4, offset = 0x4, fixed_abs, tag = 'smem constant byte address 0x4 - core index']
  #allocation1 [shape = 'u32[144,128]{1,0:T(1,128)}', space=vmem, size = 0x12000, scoped, tag = 'internal scratch']
  #allocation2 [shape = 's32[1]{0}', space=sflag, size = 0x4, scoped, tag = 'scoped memory for tpu_custom_call.1']
  #allocation3 [shape = 's32[1]{0:T(128)S(6)}', space=smem, size = 0x200, scoped, tag = 'prefetched SMEM operand 0']
  %s0 = inlined_call_operand.<no memory space> [shape: s32[1], index: 0, kind: input, shape index: {}]
  %s1 = inlined_call_operand.vmem [shape: f32[4,8], index: 1, kind: input, shape index: {}]
  %s2 = inlined_call_operand.vmem [shape: f32[32,4], index: 2, kind: input, shape index: {}]
  %s3 = inlined_call_operand.vmem [shape: f32[32,1], index: 3, kind: input, shape index: {}]
  %s4 = inlined_call_operand.vmem [shape: f32[4,32], index: 4, kind: input, shape index: {}]
  %s5 = inlined_call_operand.vmem [shape: f32[4,1], index: 5, kind: input, shape index: {}]
  %s6 = inlined_call_operand.hbm [shape: f32[4,8], index: 6, kind: output, shape index: {}]
  %s7 = sld [smem:[#allocation0]]
  $region30: #{tpu_custom_call.1} parent=0
    _
  %s9 = ssub.s32 1, %s7
  %s10 = scalar_select 0, %s9, %s7
  %11 = sst [smem:[#allocation3]] %s0
  $region1: #{tpu_custom_call.1} parent=0
    #allocation4 [shape = 'u8[2048]{0}', space=vmem, size = 0x800, scoped, tag = 'output window, operand 0, single buffered']
    #allocation5 [shape = 's32[1]{0}', space=sflag, size = 0x4, scoped, tag = 'scoped memory for tpu_custom_call.1']
    %12 = vsyncpa [#allocation5], 0
    // Predicated region
    $region2: #{tpu_custom_call.1} parent=1 // pred_check
      _
    $region3: #{tpu_custom_call.1} parent=1 // pred_check_branch
      %14 = sbr.rel (0) target = $region5
    $region4: #{tpu_custom_call.1} parent=1 // pred_region
      _
    $region5: #{tpu_custom_call.1} parent=1 // pred_fallthru
      _
    // Predicated region
    $region6: #{tpu_custom_call.1} parent=1 // pred_check
      _
    $region7: #{tpu_custom_call.1} parent=1 // pred_check_branch
      %16 = sbr.rel (0) target = $region9
    $region8: #{tpu_custom_call.1} parent=1 // pred_region
      _
    $region9: #{tpu_custom_call.1} parent=1 // pred_fallthru
      _
    // Predicated region
    $region10: #{tpu_custom_call.1} parent=1 // pred_check
      _
    $region11: #{tpu_custom_call.1} parent=1 // pred_check_branch
      %18 = sbr.rel (0) target = $region13
    $region12: #{tpu_custom_call.1} parent=1 // pred_region
      _
    $region13: #{tpu_custom_call.1} parent=1 // pred_fallthru
      _
    // Predicated region
    $region14: #{tpu_custom_call.1} parent=1 // pred_check
      _
    $region15: #{tpu_custom_call.1} parent=1 // pred_check_branch
      %20 = sbr.rel (0) target = $region17
    $region16: #{tpu_custom_call.1} parent=1 // pred_region
      _
    $region17: #{tpu_custom_call.1} parent=1 // pred_fallthru
      _
    // Predicated region
    $region18: #{tpu_custom_call.1} parent=1 // pred_check
      _
    $region19: #{tpu_custom_call.1} parent=1 // pred_check_branch
      %22 = sbr.rel (0) target = $region21
    $region20: #{tpu_custom_call.1} parent=1 // pred_region
      _
    $region21: #{tpu_custom_call.1} parent=1 // pred_fallthru
      _
    %v23 = vld [vmem:[%s2] sm:$0xff]
    %v24 = vld [vmem:[%s2 + $0x8] sm:$0xff]
    %v25 = vld [vmem:[%s2 + $0x10] sm:$0xff]
    %v26 = vld [vmem:[%s2 + $0x18] sm:$0xff]
    %v27 = vld [vmem:[%s1] sm:$0xf]
    %v28 = vld [vmem:[%s3] sm:$0xff]
    %v29 = vld [vmem:[%s3 + $0x8] sm:$0xff]
    %v30 = vld [vmem:[%s3 + $0x10] sm:$0xff]
    %v31 = vld [vmem:[%s3 + $0x18] sm:$0xff]
    %33 = vset.pattern.permute.xlu0 0
    %34 = vperm.xlu0 %33, %v28
    %v35 = vpop.permute.xlu0 %34
    %38 = vset.pattern.permute.xlu0 0
    %39 = vperm.xlu0 %38, %v29
    %v40 = vpop.permute.xlu0 %39
    %43 = vset.pattern.permute.xlu0 0
    %44 = vperm.xlu0 %43, %v30
    %v45 = vpop.permute.xlu0 %44
    %48 = vset.pattern.permute.xlu0 0
    %49 = vperm.xlu0 %48, %v31
    %v50 = vpop.permute.xlu0 %49
    %vm52 = vcmask 31744
    %v54 = vsel %vm52, %v23, 0
    %v57 = vsel %vm52, %v24, 0
    %v60 = vsel %vm52, %v25, 0
    %v63 = vsel %vm52, %v26, 0
    %vm65 = vcmask 1043456
    %v67 = vsel %vm65, %v27, 0
    %69 = vmatprep.subr.mxu0 0.0
    %70 = vmatpush1.msra.mxu0 %v67
    %71 = vmatprep.subr.mxu0 0.0
    %72 = vmatpush1.msra.mxu0 0.0
    %73 = vmatprep.subr.mxu0 0.0
    %74 = vmatpush1.msra.mxu0 0.0
    %75 = vmatprep.subr.mxu0 0.0
    %76 = vmatpush1.msra.mxu0 0.0
    %77 = vmatprep.subr.mxu0 0.0
    %78 = vmatpush1.msra.mxu0 0.0
    %79 = vmatprep.subr.mxu0 0.0
    %80 = vmatpush1.msra.mxu0 0.0
    %81 = vmatprep.subr.mxu0 0.0
    %82 = vmatpush1.msra.mxu0 0.0
    %83 = vmatprep.subr.mxu0 0.0
    %84 = vmatpush1.msra.mxu0 0.0
    %85 = vmatprep.subr.mxu0 0.0
    %86 = vmatpush1.msra.mxu0 0.0
    %87 = vmatprep.subr.mxu0 0.0
    %88 = vmatpush1.msra.mxu0 0.0
    %89 = vmatprep.subr.mxu0 0.0
    %90 = vmatpush1.msra.mxu0 0.0
    %91 = vmatprep.subr.mxu0 0.0
    %92 = vmatpush1.msra.mxu0 0.0
    %93 = vmatprep.subr.mxu0 0.0
    %94 = vmatpush1.msra.mxu0 0.0
    %95 = vmatprep.subr.mxu0 0.0
    %96 = vmatpush1.msra.mxu0 0.0
    %97 = vmatprep.subr.mxu0 0.0
    %98 = vmatpush1.msra.mxu0 0.0
    %99 = vmatprep.subr.mxu0 0.0
    %100 = vmatpush1.msra.mxu0 0.0
    %101 = vmatprep.subr.mxu0 0.0
    %102 = vmatpush1.msra.mxu0 0.0
    %103 = vmatprep.subr.mxu0 0.0
    %104 = vmatpush1.msra.mxu0 0.0
    %105 = vmatprep.subr.mxu0 0.0
    %106 = vmatpush1.msra.mxu0 0.0
    %107 = vmatprep.subr.mxu0 0.0
    %108 = vmatpush1.msra.mxu0 0.0
    %109 = vmatprep.subr.mxu0 0.0
    %110 = vmatpush1.msra.mxu0 0.0
    %111 = vmatprep.subr.mxu0 0.0
    %112 = vmatpush1.msra.mxu0 0.0
    %113 = vmatprep.subr.mxu0 0.0
    %114 = vmatpush1.msra.mxu0 0.0
    %115 = vmatprep.subr.mxu0 0.0
    %116 = vmatpush1.msra.mxu0 0.0
    %117 = vmatprep.subr.mxu0 0.0
    %118 = vmatpush1.msra.mxu0 0.0
    %119 = vmatprep.subr.mxu0 0.0
    %120 = vmatpush1.msra.mxu0 0.0
    %121 = vmatprep.subr.mxu0 0.0
    %122 = vmatpush1.msra.mxu0 0.0
    %123 = vmatprep.subr.mxu0 0.0
    %124 = vmatpush1.msra.mxu0 0.0
    %125 = vmatprep.subr.mxu0 0.0
    %126 = vmatpush1.msra.mxu0 0.0
    %127 = vmatprep.subr.mxu0 0.0
    %128 = vmatpush1.msra.mxu0 0.0
    %129 = vmatprep.subr.mxu0 0.0
    %130 = vmatpush1.msra.mxu0 0.0
    %131 = vmatprep.subr.mxu0 0.0
    %132 = vmatpush1.msra.mxu0 0.0
    %133 = vmatprep.mubr.f32.mxu0 0.0
    %134 = vmatmul.mubr.f32.gmra.mrb[0].mxu0 %v54
    %v135 = vpop.f32.mrb[0].mxu0
    %v136 = vadd.f32 %v35, %v135
    %v137 = vpop.f32.mrb[0].mxu0
    %138 = vmatprep.mubr.f32.mxu0 0.0
    %139 = vmatmul.mubr.f32.gmra.mrb[0].mxu0 %v57
    %v140 = vpop.f32.mrb[0].mxu0
    %v141 = vadd.f32 %v40, %v140
    %v142 = vpop.f32.mrb[0].mxu0
    %143 = vmatprep.mubr.f32.mxu0 0.0
    %144 = vmatmul.mubr.f32.gmra.mrb[0].mxu0 %v60
    %v145 = vpop.f32.mrb[0].mxu0
    %v146 = vadd.f32 %v45, %v145
    %v147 = vpop.f32.mrb[0].mxu0
    %148 = vmatprep.mubr.f32.mxu0 0.0
    %149 = vmatmul.mubr.f32.gmra.mrb[0].mxu0 %v63
    %v150 = vpop.f32.mrb[0].mxu0
    %v151 = vadd.f32 %v50, %v150
    %v152 = vpop.f32.mrb[0].mxu0
    %153 = vdwg.mxu0
    %v154 = vmax.f32 %v136, 0.0
    %v155 = vmax.f32 %v141, 0.0
    %v156 = vmax.f32 %v146, 0.0
    %v157 = vmax.f32 %v151, 0.0
    %v158 = vld [vmem:[%s4] sm:$0xf]
    %v159 = vld [vmem:[%s5] sm:$0xf]
    %161 = vset.pattern.permute.xlu0 0
    %162 = vperm.xlu0 %161, %v159
    %v163 = vpop.permute.xlu0 %162
    %vm165 = vcmask 261120
    %v167 = vsel %vm165, %v158, 0
    %169 = vmatprep.subr.mxu0 0.0
    %170 = vmatpush1.msra.mxu0 %v154
    %171 = vmatprep.subr.mxu0 0.0
    %172 = vmatpush1.msra.mxu0 %v155
    %173 = vmatprep.subr.mxu0 0.0
    %174 = vmatpush1.msra.mxu0 %v156
    %175 = vmatprep.subr.mxu0 0.0
    %176 = vmatpush1.msra.mxu0 %v157
    %177 = vmatprep.subr.mxu0 0.0
    %178 = vmatpush1.msra.mxu0 0.0
    %179 = vmatprep.subr.mxu0 0.0
    %180 = vmatpush1.msra.mxu0 0.0
    %181 = vmatprep.subr.mxu0 0.0
    %182 = vmatpush1.msra.mxu0 0.0
    %183 = vmatprep.subr.mxu0 0.0
    %184 = vmatpush1.msra.mxu0 0.0
    %185 = vmatprep.subr.mxu0 0.0
    %186 = vmatpush1.msra.mxu0 0.0
    %187 = vmatprep.subr.mxu0 0.0
    %188 = vmatpush1.msra.mxu0 0.0
    %189 = vmatprep.subr.mxu0 0.0
    %190 = vmatpush1.msra.mxu0 0.0
    %191 = vmatprep.subr.mxu0 0.0
    %192 = vmatpush1.msra.mxu0 0.0
    %193 = vmatprep.subr.mxu0 0.0
    %194 = vmatpush1.msra.mxu0 0.0
    %195 = vmatprep.subr.mxu0 0.0
    %196 = vmatpush1.msra.mxu0 0.0
    %197 = vmatprep.subr.mxu0 0.0
    %198 = vmatpush1.msra.mxu0 0.0
    %199 = vmatprep.subr.mxu0 0.0
    %200 = vmatpush1.msra.mxu0 0.0
    %201 = vmatprep.subr.mxu0 0.0
    %202 = vmatpush1.msra.mxu0 0.0
    %203 = vmatprep.subr.mxu0 0.0
    %204 = vmatpush1.msra.mxu0 0.0
    %205 = vmatprep.subr.mxu0 0.0
    %206 = vmatpush1.msra.mxu0 0.0
    %207 = vmatprep.subr.mxu0 0.0
    %208 = vmatpush1.msra.mxu0 0.0
    %209 = vmatprep.subr.mxu0 0.0
    %210 = vmatpush1.msra.mxu0 0.0
    %211 = vmatprep.subr.mxu0 0.0
    %212 = vmatpush1.msra.mxu0 0.0
    %213 = vmatprep.subr.mxu0 0.0
    %214 = vmatpush1.msra.mxu0 0.0
    %215 = vmatprep.subr.mxu0 0.0
    %216 = vmatpush1.msra.mxu0 0.0
    %217 = vmatprep.subr.mxu0 0.0
    %218 = vmatpush1.msra.mxu0 0.0
    %219 = vmatprep.subr.mxu0 0.0
    %220 = vmatpush1.msra.mxu0 0.0
    %221 = vmatprep.subr.mxu0 0.0
    %222 = vmatpush1.msra.mxu0 0.0
    %223 = vmatprep.subr.mxu0 0.0
    %224 = vmatpush1.msra.mxu0 0.0
    %225 = vmatprep.subr.mxu0 0.0
    %226 = vmatpush1.msra.mxu0 0.0
    %227 = vmatprep.subr.mxu0 0.0
    %228 = vmatpush1.msra.mxu0 0.0
    %229 = vmatprep.subr.mxu0 0.0
    %230 = vmatpush1.msra.mxu0 0.0
    %231 = vmatprep.subr.mxu0 0.0
    %232 = vmatpush1.msra.mxu0 0.0
    %233 = vmatprep.mubr.f32.mxu0 0.0
    %234 = vmatmul.mubr.f32.gmra.mrb[0].mxu0 %v167
    %v235 = vpop.f32.mrb[0].mxu0
    %v236 = vadd.f32 %v163, %v235
    %v237 = vpop.f32.mrb[0].mxu0
    %238 = vdwg.mxu0
    %vm239 = vcmask 60416
    %240 = vst.msk [vmem:[#allocation4] sm:$0xf] %vm239, %v236
    // Predicated region
    $region22: #{tpu_custom_call.1} parent=1 // pred_check
      _
    $region23: #{tpu_custom_call.1} parent=1 // pred_check_branch
      %242 = sbr.rel (0) target = $region25
    $region24: #{tpu_custom_call.1} parent=1 // pred_region
      %s244 = ssub.s32 64, 64
      %245 = vsyncadd [#allocation5], %s244
      %s247 = sshll.u32 [#allocation4], 4
      %s248 = int_to_ptr.vmem [resolvable:$true] %s247
      %250 = dma.vmem_to_hbm [thread:$0]  %s248, 64, %s6, [#allocation5]
    $region25: #{tpu_custom_call.1} parent=1 // pred_fallthru
      _
    // Predicated region
    $region26: #{tpu_custom_call.1} parent=1 // pred_check
      _
    $region27: #{tpu_custom_call.1} parent=1 // pred_check_branch
      %252 = sbr.rel (0) target = $region29
    $region28: #{tpu_custom_call.1} parent=1 // pred_region
      %253 = dma.done [#allocation5], 64
    $region29: #{tpu_custom_call.1} parent=1 // pred_fallthru
      _
    %254 = vsyncpa [#allocation5], 1

</llo_original>
